<compile_context>
chip_gen: v6e
topology: v6e:2x2x1
jax: 0.10.0
libtpu: 0.0.40
codegen_flags: <defaults>
</compile_context>

<pallas_src>
import math
from functools import partial

import jax
import jax.numpy as jnp
from jax import lax
from jax.experimental import pallas as pl
from jax.experimental.pallas import tpu as pltpu


# ---------------------------------------------------------------------------
# Tiling / budget helpers
# ---------------------------------------------------------------------------

_VMEM_LIMIT_CACHE = [None]


def _vmem_limit():
    """Per-generation VMEM budget (~75% of physical, capped at 100 MiB)."""
    if _VMEM_LIMIT_CACHE[0] is None:
        try:
            cap = int(pltpu.get_tpu_info().vmem_capacity_bytes)
            _VMEM_LIMIT_CACHE[0] = max(32 * 1024 * 1024,
                                       min(cap * 3 // 4, 100 * 1024 * 1024))
        except Exception:
            _VMEM_LIMIT_CACHE[0] = 48 * 1024 * 1024
    return _VMEM_LIMIT_CACHE[0]


def _min_row_tile(h1, w1):
    """Smallest th with (th*w1) % 128 == 0 and 2*th % 8 == 0 (or th == h1)."""
    t0 = 128 // math.gcd(w1, 128)
    t0 = (t0 * 4) // math.gcd(t0, 4)          # lcm(t0, 4)
    return t0


def _pick_row_tile(n, h1, w1, cin, cout, target_lanes=1024):
    """Rows of x1 processed per grid step.

    Legality: th == h1 (full) OR th is a multiple of t0 (so the flat x1 block's
    lane extent is a multiple of 128 and the output block's second-minor dim
    2*th is a multiple of 8).  Aims at ~target_lanes x1 lanes per step, caps by
    a VMEM estimate, and guarantees >=2 parallel grid steps when possible
    (v7x shards the parallel axes over its 2 TensorCores).
    """
    t0 = _min_row_tile(h1, w1)

    bytes_per_lane = 8 * (cin + 8 * cout)      # f32 x1/x2/out blocks, double-buffered
    max_lanes = max(128, (24 * 1024 * 1024) // bytes_per_lane)
    target = max(128, min(target_lanes, max_lanes))

    if t0 >= h1:
        th = h1
    else:
        th = min(h1, t0 * max(1, target // (t0 * w1)))

    if n * (-(-h1 // th)) < 2 and h1 > 1:
        half = -(-h1 // 2)
        half = -(-half // t0) * t0
        if half < h1:
            th = half
    return th


# ---------------------------------------------------------------------------
# Fast path: fully fused deconv + tap interleave + bias + x2 add (exact 2x case)
# ---------------------------------------------------------------------------

def _fast_kernel(cout, th, w1, x1_ref, x2_ref, w_ref, b_ref, o_ref):
    x = x1_ref[0]                                               # (Cin, th*W1)
    # One MXU push: all 4 taps' channel mixes at once (rows ordered t*Cout + co).
    y = jnp.dot(w_ref[...], x, preferred_element_type=jnp.float32)
    y = y + b_ref[...]                                          # (4*Cout, L) + bias
    # Split taps (static sublane slices) and restore the (th, W1) spatial shape.
    taps = [y[t * cout:(t + 1) * cout, :].reshape(cout, th, w1) for t in range(4)]
    # Interleave dx along lanes (w -> 2w+dx), then dy along sublanes (h -> 2h+dy).
    row0 = jnp.stack([taps[0], taps[1]], axis=-1).reshape(cout, th, 2 * w1)   # dy=0
    row1 = jnp.stack([taps[2], taps[3]], axis=-1).reshape(cout, th, 2 * w1)   # dy=1
    full = jnp.stack([row0, row1], axis=2).reshape(cout, 2 * th, 2 * w1)
    o_ref[0] = (full + x2_ref[0].astype(jnp.float32)).astype(o_ref.dtype)


def _build_fast_call(n, cin, cout, h1, w1, th, out_dtype):
    L = th * w1
    grid = (n, pl.cdiv(h1, th))
    kernel = partial(_fast_kernel, cout, th, w1)

    def call(x1_flat, x2, w4, b4):
        return pl.pallas_call(
            kernel,
            out_shape=jax.ShapeDtypeStruct((n, cout, 2 * h1, 2 * w1), out_dtype),
            grid=grid,
            in_specs=[
                pl.BlockSpec((1, cin, L), lambda b, i: (b, 0, i)),
                pl.BlockSpec((1, cout, 2 * th, 2 * w1), lambda b, i: (b, 0, i, 0)),
                pl.BlockSpec((4 * cout, cin), lambda b, i: (0, 0)),
                pl.BlockSpec((4 * cout, 1), lambda b, i: (0, 0)),
            ],
            out_specs=pl.BlockSpec((1, cout, 2 * th, 2 * w1), lambda b, i: (b, 0, i, 0)),
            compiler_params=pltpu.CompilerParams(
                dimension_semantics=("parallel", "parallel"),
                vmem_limit_bytes=_vmem_limit(),
            ),
        )(x1_flat, x2, w4, b4)

    return call


_FAST_CACHE = {}


def _get_fast_fn(n, cin, cout, h1, w1, th, x1_dtype, x2_dtype, w_dtype):
    """Compile-probe the fast kernel once per signature; None if it won't lower."""
    key = (n, cin, cout, h1, w1, th, str(x1_dtype), str(x2_dtype), str(w_dtype))
    if key not in _FAST_CACHE:
        fn = jax.jit(_build_fast_call(n, cin, cout, h1, w1, th, x2_dtype))
        try:
            fn.lower(
                jax.ShapeDtypeStruct((n, cin, h1 * w1), x1_dtype),
                jax.ShapeDtypeStruct((n, cout, 2 * h1, 2 * w1), x2_dtype),
                jax.ShapeDtypeStruct((4 * cout, cin), w_dtype),
                jax.ShapeDtypeStruct((4 * cout, 1), jnp.float32),
            ).compile()
            _FAST_CACHE[key] = fn
        except Exception:
            _FAST_CACHE[key] = None
    return _FAST_CACHE[key]


# ---------------------------------------------------------------------------
# Fallback path: Pallas tap-major matmul kernel + fused XLA interleave/pad/add
# ---------------------------------------------------------------------------

def _taps_kernel(x1_ref, w_ref, b_ref, o_ref):
    y = jnp.dot(w_ref[...], x1_ref[0], preferred_element_type=jnp.float32)
    o_ref[0] = (y + b_ref[...]).astype(o_ref.dtype)


def _deconv_taps(x1, w4, b4):
    """ConvTranspose2d(k=2, s=2) in tap-major layout: (N, 4*Cout, H1*W1)."""
    n, cin, h1, w1 = x1.shape
    cout4 = w4.shape[0]
    th = _pick_row_tile(n, h1, w1, cin, cout4 // 4)
    L = th * w1
    x1_flat = x1.reshape(n, cin, h1 * w1)
    return pl.pallas_call(
        _taps_kernel,
        out_shape=jax.ShapeDtypeStruct((n, cout4, h1 * w1), jnp.float32),
        grid=(n, pl.cdiv(h1, th)),
        in_specs=[
            pl.BlockSpec((1, cin, L), lambda b, i: (b, 0, i)),
            pl.BlockSpec((cout4, cin), lambda b, i: (0, 0)),
            pl.BlockSpec((cout4, 1), lambda b, i: (0, 0)),
        ],
        out_specs=pl.BlockSpec((1, cout4, L), lambda b, i: (b, 0, i)),
        compiler_params=pltpu.CompilerParams(
            dimension_semantics=("parallel", "parallel"),
            vmem_limit_bytes=_vmem_limit(),
        ),
    )(x1_flat, w4, b4)


@partial(jax.jit, static_argnames=("h1", "w1", "pad"))
def _tap_epilogue(y, x2, h1, w1, pad):
    # TODO(synk): the tap interleave + F.pad + skip-add epilogue stays in XLA on
    # this (fallback / spatial-mismatch) path.
    n, cout4, _ = y.shape
    cout = cout4 // 4
    y = y.reshape(n, 2, 2, cout, h1, w1)
    y = jnp.transpose(y, (0, 3, 4, 1, 5, 2)).reshape(n, cout, 2 * h1, 2 * w1)
    if any(pad):
        y = lax.pad(y, jnp.zeros((), y.dtype),
                    ((0, 0, 0), (0, 0, 0),
                     (pad[0], pad[1], 0), (pad[2], pad[3], 0)))
    return (x2.astype(y.dtype) + y).astype(x2.dtype)


# ---------------------------------------------------------------------------
# Reference (also the last-resort path for exotic widths)
# ---------------------------------------------------------------------------

def _reference(x1, x2, weight, bias):
    n, cin, h1, w1 = x1.shape
    cout = weight.shape[1]
    r = jnp.einsum('ncij,coyx->noiyjx', x1, weight)
    r = r.reshape(n, cout, 2 * h1, 2 * w1) + bias[None, :, None, None]
    dy = x2.shape[2] - 2 * h1
    dx = x2.shape[3] - 2 * w1
    r = lax.pad(r, jnp.zeros((), r.dtype),
                ((0, 0, 0), (0, 0, 0),
                 (dy // 2, dy - dy // 2, 0),
                 (dx // 2, dx - dx // 2, 0)))
    return x2 + r


# ---------------------------------------------------------------------------
# Public forward
# ---------------------------------------------------------------------------

def up_forward(x1, x2, weight, bias):
    """CBDNet `up` forward:  x2 + F.pad(ConvTranspose2d(x1, k=2, stride=2))."""
    n, cin, h1, w1 = x1.shape
    cout = weight.shape[1]
    n2, c2, h2, w2 = x2.shape
    assert n2 == n and c2 == cout

    # Exotic widths where even the smallest legal lane tile would blow VMEM.
    t_min = min(_min_row_tile(h1, w1), h1)
    if 8 * (cin + 8 * cout) * t_min * w1 > 80 * 1024 * 1024:
        # TODO(synk): no legal Pallas tiling for these widths; keep the XLA path.
        return _reference(x1, x2, weight, bias).astype(x2.dtype)

    # Fused matmul LHS: rows ordered (dy, dx, co) i.e. t*Cout + co, t = 2*dy + dx.
    w4 = jnp.transpose(weight, (2, 3, 1, 0)).reshape(4 * cout, cin)
    b4 = jnp.tile(bias.astype(jnp.float32).reshape(1, cout), (4, 1)).reshape(4 * cout, 1)

    if h2 == 2 * h1 and w2 == 2 * w1:
        th = _pick_row_tile(n, h1, w1, cin, cout)
        fast = _get_fast_fn(n, cin, cout, h1, w1, th, x1.dtype, x2.dtype, w4.dtype)
        if fast is not None:
            return fast(x1.reshape(n, cin, h1 * w1), x2, w4, b4)

    # General / fallback path.
    y = _deconv_taps(x1, w4, b4)
    dy = h2 - 2 * h1
    dx = w2 - 2 * w1
    return _tap_epilogue(y, x2, h1=h1, w1=w1,
                         pad=(dy // 2, dy - dy // 2, dx // 2, dx - dx // 2))


# ---------------------------------------------------------------------------
# Self-test
# ---------------------------------------------------------------------------

if __name__ == "__main__":
    key = jax.random.PRNGKey(0)
    k = jax.random.split(key, 8)

    in_ch, out_ch = 16, 8
    weight = jax.random.normal(k[0], (in_ch, out_ch, 2, 2), dtype=jnp.float32) * 0.1
    bias = jax.random.normal(k[1], (out_ch,), dtype=jnp.float32) * 0.1

    def check(x1, x2):
        out = jax.block_until_ready(up_forward(x1, x2, weight, bias))
        ref = _reference(x1, x2, weight, bias)
        assert out.shape == x2.shape
        err = float(jnp.max(jnp.abs(out - ref)))
        assert err < 1e-4, err

    # 1) standard exact-2x skip connection
    x1 = jax.random.normal(k[2], (2, in_ch, 16, 16), dtype=jnp.float32)
    x2 = jax.random.normal(k[3], (2, out_ch, 32, 32), dtype=jnp.float32)
    check(x1, x2)

    # 2) exact-2x with a row tile that does not divide H1 (partial last block,
    #    also exercises the >=2-grid-steps split)
    x1 = jax.random.normal(k[4], (1, in_ch, 12, 16), dtype=jnp.float32)
    x2 = jax.random.normal(k[5], (1, out_ch, 24, 32), dtype=jnp.float32)
    check(x1, x2)

    # 3) spatial mismatch -> F.pad path (odd sizes)
    x1 = jax.random.normal(k[6], (1, in_ch, 7, 5), dtype=jnp.float32)
    x2 = jax.random.normal(k[7], (1, out_ch, 16, 12), dtype=jnp.float32)
    check(x1, x2)

    print("KERNEL_OK")
</pallas_src>

<mosaic_0001>
module attributes {stable_mosaic.version = 11 : i64} {
  func.func @_taps_kernel(%arg0: i32, %arg1: i32, %arg2: memref<1x16x256xf32, #tpu.memory_space<vmem>>, %arg3: memref<32x16xf32, #tpu.memory_space<vmem>>, %arg4: memref<32x1xf32, #tpu.memory_space<vmem>>, %arg5: memref<1x32x256xf32, #tpu.memory_space<vmem>>) attributes {dimension_semantics = [#tpu.dimension_semantics<parallel>, #tpu.dimension_semantics<parallel>], iteration_bounds = array<i64: 2, 1>, scalar_prefetch = 0 : i64, scratch_operands = 0 : i64, tpu.core_type = #tpu.core_type<tc>, window_params = [{transform_indices = @transform_0, window_bounds = array<i64: 1, 16, 256>}, {pipeline_mode = #tpu.pipeline_mode<synchronous>, transform_indices = @transform_1, window_bounds = array<i64: 32, 16>}, {pipeline_mode = #tpu.pipeline_mode<synchronous>, transform_indices = @transform_2, window_bounds = array<i64: 32, 1>}, {transform_indices = @transform_3, window_bounds = array<i64: 1, 32, 256>}]} {
    %c0 = arith.constant 0 : index
    %c0_0 = arith.constant 0 : index
    %0 = vector.load %arg3[%c0, %c0_0] : memref<32x16xf32, #tpu.memory_space<vmem>>, vector<32x16xf32>
    %c0_1 = arith.constant 0 : index
    %c0_2 = arith.constant 0 : index
    %c0_3 = arith.constant 0 : index
    %1 = vector.load %arg2[%c0_1, %c0_2, %c0_3] : memref<1x16x256xf32, #tpu.memory_space<vmem>>, vector<1x16x256xf32>
    %2 = vector.shape_cast %1 : vector<1x16x256xf32> to vector<16x256xf32>
    %cst = arith.constant dense<0.000000e+00> : vector<32x256xf32>
    %3 = tpu.matmul %0, %2, %cst {dimension_numbers = #tpu.dot_dimension_numbers<[1], [0], [0], [1], [0, 0, 1, 1], [], []>} : vector<32x16xf32>, vector<16x256xf32>, vector<32x256xf32> -> vector<32x256xf32>
    %c0_4 = arith.constant 0 : index
    %c0_5 = arith.constant 0 : index
    %4 = vector.load %arg4[%c0_4, %c0_5] : memref<32x1xf32, #tpu.memory_space<vmem>>, vector<32x1xf32>
    %5 = vector.broadcast %4 : vector<32x1xf32> to vector<32x256xf32>
    %6 = arith.addf %3, %5 : vector<32x256xf32>
    %c0_6 = arith.constant 0 : index
    %c0_7 = arith.constant 0 : index
    %c0_8 = arith.constant 0 : index
    %7 = vector.load %arg5[%c0_6, %c0_7, %c0_8] : memref<1x32x256xf32, #tpu.memory_space<vmem>>, vector<1x32x256xf32>
    %8 = vector.shape_cast %7 : vector<1x32x256xf32> to vector<32x256xf32>
    %9 = vector.shape_cast %6 : vector<32x256xf32> to vector<1x32x256xf32>
    tpu.vector_store %arg5[%c0_6, %c0_7, %c0_8], %9 {strides = array<i32>} : memref<1x32x256xf32, #tpu.memory_space<vmem>>, vector<1x32x256xf32>,
    return
  }
  func.func @transform_0(%arg0: i32, %arg1: i32) -> (i32, i32, i32) {
    %c0_i32 = arith.constant 0 : i32
    %c0_i32_0 = arith.constant 0 : i32
    return %arg0, %c0_i32, %arg1 : i32, i32, i32
  }
  func.func @transform_1(%arg0: i32, %arg1: i32) -> (i32, i32) {
    %c0_i32 = arith.constant 0 : i32
    %c0_i32_0 = arith.constant 0 : i32
    %c0_i32_1 = arith.constant 0 : i32
    return %c0_i32, %c0_i32_0 : i32, i32
  }
  func.func @transform_2(%arg0: i32, %arg1: i32) -> (i32, i32) {
    %c0_i32 = arith.constant 0 : i32
    %c0_i32_0 = arith.constant 0 : i32
    %c0_i32_1 = arith.constant 0 : i32
    return %c0_i32, %c0_i32_0 : i32, i32
  }
  func.func @transform_3(%arg0: i32, %arg1: i32) -> (i32, i32, i32) {
    %c0_i32 = arith.constant 0 : i32
    %c0_i32_0 = arith.constant 0 : i32
    return %arg0, %c0_i32, %arg1 : i32, i32, i32
  }
}

</mosaic_0001>

<llo_original>
// kernel: tpu_custom_call.1
$region0: #{tpu_custom_call.1}
  #allocation0 [shape = 'u32[]', space=smem, size = 0x4, offset = 0x4, fixed_abs, tag = 'smem constant byte address 0x4 - core index']
  #allocation1 [shape = 'u32[144,128]{1,0:T(1,128)}', space=vmem, size = 0x12000, scoped, tag = 'internal scratch']
  %s0 = inlined_call_operand.vmem [shape: f32[2,16,256], index: 0, kind: input, shape index: {}]
  %s1 = inlined_call_operand.vmem [shape: f32[32,16], index: 1, kind: input, shape index: {}]
  %s2 = inlined_call_operand.vmem [shape: f32[32,1], index: 2, kind: input, shape index: {}]
  %s3 = inlined_call_operand.hbm [shape: f32[2,32,256], index: 3, kind: output, shape index: {}]
  %s4 = sld [smem:[#allocation0]]
  $region45: #{tpu_custom_call.1} parent=0
    _
  %s6 = ssub.s32 1, %s4
  %s7 = scalar_select 0, %s6, %s4
  $region1: #{tpu_custom_call.1} parent=0
    #allocation2 [shape = 'u8[65536]{0}', space=vmem, size = 0x10000, scoped, tag = 'output window, operand 0']
    #allocation3 [shape = 's32[2]{0}', space=sflag, size = 0x8, scoped, tag = 'scoped memory for tpu_custom_call.1']
    %8 = vsyncpa [#allocation3], 0
    %s9 = scalar_lea.sflag [#allocation3], 1
    %10 = vsyncpa %s9, 0
    loop: start=0, step=1, limit=4
    $region2: #{tpu_custom_call.1} parent=1 // loop_pre_header
      _
    $region3: #{tpu_custom_call.1} parent=1 // loop_header
      %s12 = sphi 0, %s16
      %p13 = scmp.ge.s32.totalorder %s12, 4
      %s19 = sphi 0, %s31
      %s20 = sphi 0, %s27
      %s21 = sphi 0, %s19
      %s22 = sphi 0, %s20
      %s23 = sphi 0, %s21
      %s24 = sphi 0, %s22
      %s36 = sphi 0, %s38
      %s39 = sphi 0, %s36
      %s40 = sphi 0, %s39
      %s56 = sphi 0, %s40
      %s60 = sphi 0, %s60
      %s62 = sphi 0, %s60
      %s63 = sphi 0, %s62
      %s77 = sphi 0, %s63
      %s81 = sphi 0, %s81
      %s83 = sphi 0, %s81
      %s84 = sphi 0, %s83
      %s98 = sphi 0, %s84
      %s106 = sphi 0, %s108
      %s109 = sphi 0, %s106
      %s110 = sphi 0, %s109
      %s126 = sphi 0, %s110
    $region4: #{tpu_custom_call.1} parent=1 // loop_header_branch
      %15 = sbr.rel (%p13) target = $region8
    $region5: #{tpu_custom_call.1} parent=1 // loop_body
      %s17 = ssub.s32 %s12, 1
      %s18 = ssub.s32 %s12, 2
      %s25 = sadd.s32 1, %s20
      %p26 = scmp.ge.s32.totalorder %s25, 1
      %s27 = scalar_select %p26, 0, %s25
      %s28 = sadd.s32 1, %s19
      %s29 = scalar_select %p26, %s28, %s19
      %p30 = scmp.ge.s32.totalorder %s29, 2
      %s31 = scalar_select %p30, 0, %s29
      %s32 = ssub.s32 %s19, %s31
      %s33 = ssub.s32 %s20, %s27
      %s34 = sor.u32 %s32, %s33
      %p35 = scmp.eq.s32.totalorder %s34, 0
      %s37 = sadd.s32 %s36, 1
      %s38 = scalar_select %p35, %s36, %s37
      %p41 = pneg %p35
      %p42 = scmp.eq.s32.totalorder %s12, 1
      %p43 = por %p41, %p42
      %p44 = scmp.ne.s32.totalorder %s36, %s39
      %p45 = scmp.eq.s32.totalorder %s12, 0
      %p46 = por %p44, %p45
      %p47 = scmp.ne.s32.totalorder %s36, %s39
      %p48 = scmp.eq.s32.totalorder %s17, 1
      %p49 = por %p47, %p48
      %p50 = scmp.ne.s32.totalorder %s39, %s40
      %p51 = scmp.eq.s32.totalorder %s17, 0
      %p52 = por %p50, %p51
      %p53 = scmp.ne.s32.totalorder %s39, %s40
      %p54 = scmp.eq.s32.totalorder %s18, 1
      %p55 = por %p53, %p54
      %p57 = scmp.ne.s32.totalorder %s40, %s56
      %p58 = scmp.eq.s32.totalorder %s18, 0
      %p59 = por %p57, %p58
      %s61 = sadd.s32 %s60, 1
      %p64 = scmp.eq.s32.totalorder %s12, 1
      %p65 = scmp.ne.s32.totalorder %s60, %s62
      %p66 = scmp.eq.s32.totalorder %s12, 0
      %p67 = por %p65, %p66
      %p68 = scmp.ne.s32.totalorder %s60, %s62
      %p69 = scmp.eq.s32.totalorder %s17, 1
      %p70 = por %p68, %p69
      %p71 = scmp.ne.s32.totalorder %s62, %s63
      %p72 = scmp.eq.s32.totalorder %s17, 0
      %p73 = por %p71, %p72
      %p74 = scmp.ne.s32.totalorder %s62, %s63
      %p75 = scmp.eq.s32.totalorder %s18, 1
      %p76 = por %p74, %p75
      %p78 = scmp.ne.s32.totalorder %s63, %s77
      %p79 = scmp.eq.s32.totalorder %s18, 0
      %p80 = por %p78, %p79
      %s82 = sadd.s32 %s81, 1
      %p85 = scmp.eq.s32.totalorder %s12, 1
      %p86 = scmp.ne.s32.totalorder %s81, %s83
      %p87 = scmp.eq.s32.totalorder %s12, 0
      %p88 = por %p86, %p87
      %p89 = scmp.ne.s32.totalorder %s81, %s83
      %p90 = scmp.eq.s32.totalorder %s17, 1
      %p91 = por %p89, %p90
      %p92 = scmp.ne.s32.totalorder %s83, %s84
      %p93 = scmp.eq.s32.totalorder %s17, 0
      %p94 = por %p92, %p93
      %p95 = scmp.ne.s32.totalorder %s83, %s84
      %p96 = scmp.eq.s32.totalorder %s18, 1
      %p97 = por %p95, %p96
      %p99 = scmp.ne.s32.totalorder %s84, %s98
      %p100 = scmp.eq.s32.totalorder %s18, 0
      %p101 = por %p99, %p100
      %s102 = ssub.s32 %s19, %s31
      %s103 = ssub.s32 %s20, %s27
      %s104 = sor.u32 %s102, %s103
      %p105 = scmp.eq.s32.totalorder %s104, 0
      %s107 = sadd.s32 %s106, 1
      %s108 = scalar_select %p105, %s106, %s107
      %p111 = pneg %p105
      %p112 = scmp.eq.s32.totalorder %s12, 1
      %p113 = por %p111, %p112
      %p114 = scmp.ne.s32.totalorder %s106, %s109
      %p115 = scmp.eq.s32.totalorder %s12, 0
      %p116 = por %p114, %p115
      %p117 = scmp.ne.s32.totalorder %s106, %s109
      %p118 = scmp.eq.s32.totalorder %s17, 1
      %p119 = por %p117, %p118
      %p120 = scmp.ne.s32.totalorder %s109, %s110
      %p121 = scmp.eq.s32.totalorder %s17, 0
      %p122 = por %p120, %p121
      %p123 = scmp.ne.s32.totalorder %s109, %s110
      %p124 = scmp.eq.s32.totalorder %s18, 1
      %p125 = por %p123, %p124
      %p127 = scmp.ne.s32.totalorder %s110, %s126
      %p128 = scmp.eq.s32.totalorder %s18, 0
      %p129 = por %p127, %p128
      %p130 = scmp.le.s32.totalorder 1, %s12
      %p131 = scmp.lt.s32.totalorder %s12, 3
      %p132 = pnand %p130, %p131
      %p133 = pneg %p132
      // Predicated region
      $region9: #{tpu_custom_call.1} parent=5 // pred_check
        _
      $region10: #{tpu_custom_call.1} parent=5 // pred_check_branch
        %135 = sbr.rel (%p132) target = $region12
      $region11: #{tpu_custom_call.1} parent=5 // pred_region
        %s136 = ssub.s32 %s12, 1
        // Predicated region
        $region13: #{tpu_custom_call.1} parent=11 // pred_check
          %p137 = pneg %p73
        $region14: #{tpu_custom_call.1} parent=11 // pred_check_branch
          %139 = sbr.rel (%p137) target = $region16
        $region15: #{tpu_custom_call.1} parent=11 // pred_region
          _
        $region16: #{tpu_custom_call.1} parent=11 // pred_fallthru
          _
        // Predicated region
        $region17: #{tpu_custom_call.1} parent=11 // pred_check
          %p140 = pneg %p94
        $region18: #{tpu_custom_call.1} parent=11 // pred_check_branch
          %142 = sbr.rel (%p140) target = $region20
        $region19: #{tpu_custom_call.1} parent=11 // pred_region
          _
        $region20: #{tpu_custom_call.1} parent=11 // pred_fallthru
          _
      $region12: #{tpu_custom_call.1} parent=5 // pred_fallthru
        _
      %p143 = scmp.lt.s32.totalorder %s12, 2
      // Predicated region
      $region21: #{tpu_custom_call.1} parent=5 // pred_check
        %p144 = pneg %p143
      $region22: #{tpu_custom_call.1} parent=5 // pred_check_branch
        %146 = sbr.rel (%p144) target = $region24
      $region23: #{tpu_custom_call.1} parent=5 // pred_region
        // Predicated region
        $region25: #{tpu_custom_call.1} parent=23 // pred_check
          %p147 = pneg %p46
        $region26: #{tpu_custom_call.1} parent=23 // pred_check_branch
          %149 = sbr.rel (%p147) target = $region28
        $region27: #{tpu_custom_call.1} parent=23 // pred_region
          %s150 = smul.u32 2, %s20
          %p151 = scmp.lt.s32.totalorder %s19, 1
          %s152 = scalar_select %p151, %s19, 1
          %p153 = scmp.lt.s32.totalorder %s150, 1
          %s154 = scalar_select %p153, %s150, 1
          %s155 = smul.addr %s152, 4
          %s156 = sadd.s32 %s154, %s155
          %s157 = smul.addr %s156, 8
          %s158 = scalar_lea.vmem %s0, %s157
          %s159 = smul.u32 2, %s20
        $region28: #{tpu_custom_call.1} parent=23 // pred_fallthru
          _
      $region24: #{tpu_custom_call.1} parent=5 // pred_fallthru
        _
      %p160 = scmp.le.s32.totalorder 1, %s12
      %p161 = scmp.lt.s32.totalorder %s12, 3
      %p162 = pnand %p160, %p161
      %p163 = pneg %p162
      // Predicated region
      $region29: #{tpu_custom_call.1} parent=5 // pred_check
        _
      $region30: #{tpu_custom_call.1} parent=5 // pred_check_branch
        %165 = sbr.rel (%p162) target = $region32
      $region31: #{tpu_custom_call.1} parent=5 // pred_region
        %s166 = ssub.s32 %s12, 1
        %s167 = smul.u32 2, %s22
        %p168 = scmp.lt.s32.totalorder %s21, 1
        %s169 = scalar_select %p168, %s21, 1
        %p170 = scmp.lt.s32.totalorder %s167, 1
        %s171 = scalar_select %p170, %s167, 1
        %s172 = smul.addr %s169, 4
        %s173 = sadd.s32 %s171, %s172
        %s174 = smul.addr %s173, 8
        %s175 = scalar_lea.vmem %s0, %s174
        %p176 = pneg %p52
        %p177 = pneg %p49
        %p178 = pneg %p73
        %p179 = pneg %p70
        %p180 = pneg %p94
        %p181 = pneg %p91
        %p182 = pneg %p122
        %p183 = pneg %p119
        %s184 = sand.u32 %s109, 1
        %s185 = scalar_lea.sflag [#allocation3], %s184
        %s186 = sand.u32 %s109, 1
        %s187 = smul.addr %s186, 64
        %s188 = scalar_lea.vmem [#allocation2], %s187
        %s189 = smul.u32 2, %s22
        %p190 = scmp.lt.s32.totalorder %s21, 1
        %s191 = scalar_select %p190, %s21, 1
        %p192 = scmp.lt.s32.totalorder %s189, 1
        %s193 = scalar_select %p192, %s189, 1
        %s194 = smul.addr %s191, 4
        %s195 = sadd.s32 %s193, %s194
        %s196 = smul.addr %s195, 8
        %s197 = scalar_lea.vmem %s0, %s196
        %s198 = smul.u32 2, %s22
        %s199 = smul.u32 2, %s22
        %v200 = vld [vmem:[%s1] sm:$0xff]
        %v201 = vld [vmem:[%s1 + $0x8] sm:$0xff]
        %v202 = vld [vmem:[%s1 + $0x10] sm:$0xff]
        %v203 = vld [vmem:[%s1 + $0x18] sm:$0xff]
        %v204 = vld [vmem:[%s197] sm:$0xff]
        %v205 = vld [vmem:[%s197 + $0x8] sm:$0xff]
        %v206 = vld [vmem:[%s197 + $0x10] sm:$0xff]
        %v207 = vld [vmem:[%s197 + $0x18] sm:$0xff]
        %v208 = vld [vmem:[%s2] sm:$0xff]
        %v209 = vld [vmem:[%s2 + $0x8] sm:$0xff]
        %v210 = vld [vmem:[%s2 + $0x10] sm:$0xff]
        %v211 = vld [vmem:[%s2 + $0x18] sm:$0xff]
        %213 = vset.pattern.permute.xlu0 0
        %214 = vperm.xlu0 %213, %v208
        %v215 = vpop.permute.xlu0 %214
        %218 = vset.pattern.permute.xlu0 0
        %219 = vperm.xlu0 %218, %v209
        %v220 = vpop.permute.xlu0 %219
        %223 = vset.pattern.permute.xlu0 0
        %224 = vperm.xlu0 %223, %v210
        %v225 = vpop.permute.xlu0 %224
        %228 = vset.pattern.permute.xlu0 0
        %229 = vperm.xlu0 %228, %v211
        %v230 = vpop.permute.xlu0 %229
        %vm232 = vcmask 130048
        %v234 = vsel %vm232, %v200, 0
        %v237 = vsel %vm232, %v201, 0
        %v240 = vsel %vm232, %v202, 0
        %v243 = vsel %vm232, %v203, 0
        %245 = vmatprep.subr.mxu0 0.0
        %246 = vmatpush1.msra.mxu0 0.0
        %247 = vmatprep.subr.mxu0 0.0
        %248 = vmatpush1.msra.mxu0 0.0
        %249 = vmatprep.subr.mxu0 0.0
        %250 = vmatpush1.msra.mxu0 0.0
        %251 = vmatprep.subr.mxu0 0.0
        %252 = vmatpush1.msra.mxu0 0.0
        %253 = vmatprep.subr.mxu0 0.0
        %254 = vmatpush1.msra.mxu0 0.0
        %255 = vmatprep.subr.mxu0 0.0
        %256 = vmatpush1.msra.mxu0 0.0
        %257 = vmatprep.subr.mxu0 0.0
        %258 = vmatpush1.msra.mxu0 0.0
        %259 = vmatprep.subr.mxu0 0.0
        %260 = vmatpush1.msra.mxu0 0.0
        %261 = vmatprep.subr.mxu0 0.0
        %262 = vmatpush1.msra.mxu0 0.0
        %263 = vmatprep.subr.mxu0 0.0
        %264 = vmatpush1.msra.mxu0 0.0
        %265 = vmatprep.subr.mxu0 0.0
        %266 = vmatpush1.msra.mxu0 0.0
        %267 = vmatprep.subr.mxu0 0.0
        %268 = vmatpush1.msra.mxu0 0.0
        %269 = vmatprep.subr.mxu0 0.0
        %270 = vmatpush1.msra.mxu0 0.0
        %271 = vmatprep.subr.mxu0 0.0
        %272 = vmatpush1.msra.mxu0 0.0
        %273 = vmatprep.subr.mxu0 %v207
        %274 = vmatpush1.msra.mxu0 %v206
        %275 = vmatprep.subr.mxu0 %v205
        %276 = vmatpush1.msra.mxu0 %v204
        %277 = vmatprep.subr.mxu0 0.0
        %278 = vmatpush2.msra.mxu0 0.0
        %279 = vmatprep.subr.mxu0 0.0
        %280 = vmatpush2.msra.mxu0 0.0
        %281 = vmatprep.subr.mxu0 0.0
        %282 = vmatpush2.msra.mxu0 0.0
        %283 = vmatprep.subr.mxu0 0.0
        %284 = vmatpush2.msra.mxu0 0.0
        %285 = vmatprep.subr.mxu0 0.0
        %286 = vmatpush2.msra.mxu0 0.0
        %287 = vmatprep.subr.mxu0 0.0
        %288 = vmatpush2.msra.mxu0 0.0
        %289 = vmatprep.subr.mxu0 0.0
        %290 = vmatpush2.msra.mxu0 0.0
        %291 = vmatprep.subr.mxu0 0.0
        %292 = vmatpush2.msra.mxu0 0.0
        %293 = vmatprep.subr.mxu0 0.0
        %294 = vmatpush2.msra.mxu0 0.0
        %295 = vmatprep.subr.mxu0 0.0
        %296 = vmatpush2.msra.mxu0 0.0
        %297 = vmatprep.subr.mxu0 0.0
        %298 = vmatpush2.msra.mxu0 0.0
        %299 = vmatprep.subr.mxu0 0.0
        %300 = vmatpush2.msra.mxu0 0.0
        %301 = vmatprep.subr.mxu0 0.0
        %302 = vmatpush2.msra.mxu0 0.0
        %303 = vmatprep.subr.mxu0 0.0
        %304 = vmatpush2.msra.mxu0 0.0
        %305 = vmatprep.subr.mxu0 0.0
        %306 = vmatpush2.msra.mxu0 0.0
        %307 = vmatprep.subr.mxu0 0.0
        %308 = vmatpush2.msra.mxu0 0.0
        %309 = vmatprep.mubr.f32.mxu0 0.0
        %310 = vmatmul.mubr.f32.gmra.mxu0 %v234
        %v311 = vpop.f32.mrf.mxu0
        %v312 = vadd.f32 %v215, %v311
        %v313 = vpop.f32.mrf.mxu0
        %v314 = vadd.f32 %v215, %v313
        %315 = vmatprep.mubr.f32.mxu0 0.0
        %316 = vmatmul.mubr.f32.gmra.mxu0 %v237
        %v317 = vpop.f32.mrf.mxu0
        %v318 = vadd.f32 %v220, %v317
        %v319 = vpop.f32.mrf.mxu0
        %v320 = vadd.f32 %v220, %v319
        %321 = vmatprep.mubr.f32.mxu0 0.0
        %322 = vmatmul.mubr.f32.gmra.mxu0 %v240
        %v323 = vpop.f32.mrf.mxu0
        %v324 = vadd.f32 %v225, %v323
        %v325 = vpop.f32.mrf.mxu0
        %v326 = vadd.f32 %v225, %v325
        %327 = vmatprep.mubr.f32.mxu0 0.0
        %328 = vmatmul.mubr.f32.gmra.mxu0 %v243
        %v329 = vpop.f32.mrf.mxu0
        %v330 = vadd.f32 %v230, %v329
        %v331 = vpop.f32.mrf.mxu0
        %v332 = vadd.f32 %v230, %v331
        %333 = vdwg.mxu0
        %334 = vst [vmem:[%s188] sm:$0xff] %v312
        %335 = vst [vmem:[%s188 + $0x8] sm:$0xff] %v314
        %336 = vst [vmem:[%s188 + $0x10] sm:$0xff] %v318
        %337 = vst [vmem:[%s188 + $0x18] sm:$0xff] %v320
        %338 = vst [vmem:[%s188 + $0x20] sm:$0xff] %v324
        %339 = vst [vmem:[%s188 + $0x28] sm:$0xff] %v326
        %340 = vst [vmem:[%s188 + $0x30] sm:$0xff] %v330
        %341 = vst [vmem:[%s188 + $0x38] sm:$0xff] %v332
        %s342 = sand.u32 %s109, 1
        %s343 = scalar_lea.sflag [#allocation3], %s342
        %s344 = sand.u32 %s109, 1
        %s345 = smul.addr %s344, 64
        %s346 = scalar_lea.vmem [#allocation2], %s345
        // Predicated region
        $region33: #{tpu_custom_call.1} parent=31 // pred_check
          %p347 = pneg %p119
        $region34: #{tpu_custom_call.1} parent=31 // pred_check_branch
          %349 = sbr.rel (%p347) target = $region36
        $region35: #{tpu_custom_call.1} parent=31 // pred_region
          %s350 = smul.u32 2, %s22
          %s352 = ssub.s32 1024, 1024
          %353 = vsyncadd %s343, %s352
          %s354 = smul.addr %s21, 8
          %s355 = sadd.s32 %s350, %s354
          %s356 = smul.addr %s355, 128
          %s357 = scalar_lea.hbm %s3, %s356
          %s358 = sshll.u32 %s346, 4
          %s359 = int_to_ptr.vmem [resolvable:$true] %s358
          %364 = dma.vmem_to_hbm [thread:$0]  %s359, 1024, %s357, %s343, 256, 256, 16
        $region36: #{tpu_custom_call.1} parent=31 // pred_fallthru
          _
      $region32: #{tpu_custom_call.1} parent=5 // pred_fallthru
        _
      %p365 = scmp.le.s32.totalorder 2, %s12
      // Predicated region
      $region37: #{tpu_custom_call.1} parent=5 // pred_check
        %p366 = pneg %p365
      $region38: #{tpu_custom_call.1} parent=5 // pred_check_branch
        %368 = sbr.rel (%p366) target = $region40
      $region39: #{tpu_custom_call.1} parent=5 // pred_region
        %s369 = ssub.s32 %s12, 2
        // Predicated region
        $region41: #{tpu_custom_call.1} parent=39 // pred_check
          %p370 = pneg %p125
        $region42: #{tpu_custom_call.1} parent=39 // pred_check_branch
          %372 = sbr.rel (%p370) target = $region44
        $region43: #{tpu_custom_call.1} parent=39 // pred_region
          %s373 = sand.u32 %s110, 1
          %s374 = scalar_lea.sflag [#allocation3], %s373
          %s375 = sand.u32 %s110, 1
          %s376 = smul.addr %s375, 64
          %s377 = scalar_lea.vmem [#allocation2], %s376
          %378 = dma.done %s374, 1024
        $region44: #{tpu_custom_call.1} parent=39 // pred_fallthru
          _
      $region40: #{tpu_custom_call.1} parent=5 // pred_fallthru
        _
    $region6: #{tpu_custom_call.1} parent=1 // loop_footer
      %s16 = sadd.s32 1, %s12
    $region7: #{tpu_custom_call.1} parent=1 // loop_footer_branch
      %11 = sbr.rel target = $region3
    $region8: #{tpu_custom_call.1} parent=1 // loop_exit
      _
    %379 = vsyncpa [#allocation3], 1
    %s380 = scalar_lea.sflag [#allocation3], 1
    %381 = vsyncpa %s380, 1

</llo_original>
